<compile_context>
chip_gen: v6e
topology: v6e:2x2x1
jax: 0.10.0
libtpu: 0.0.40
codegen_flags: <defaults>
</compile_context>

<pallas_src>
import jax
import jax.numpy as jnp
from jax.experimental import pallas as pl
from jax.experimental.pallas import tpu as pltpu

# ---- module-consistent config ----
VOCAB = 50
EMBED = 32                        # embedding_dim
SEQ = 8                           # sequence length
WINDOWS = (3, 4, 5)
NCH = 128                         # conv out channels per window
NCLS = 2                          # fc output classes
MAXW = max(WINDOWS)               # 5
PAD = MAXW - 1                    # 4 : shared left zero-pad
T_OUT = SEQ + PAD                 # 12: longest conv output length
STRIDE = ((T_OUT + 15) // 16) * 16  # 16: per-sequence row stride (sublane-tile aligned)
NCOLS = NCH * len(WINDOWS)        # 384
BB = 8                            # sequences per grid step
M_BLK = BB * STRIDE               # 128 conv rows per grid step
KDIM = 256                        # one-hot width: MAXW*VOCAB = 250, padded to 2 lane tiles
KCOLS = MAXW * EMBED              # 160: im2col width (5 taps x E)
OUT_LANES = 128                   # lane-dense output width (first NCLS lanes valid)


def cnn_kernel(oh_ref,        # VMEM (M_BLK, KDIM)     one-hot im2col token selectors
               embbd_ref,     # VMEM (KDIM, KCOLS)     block-diagonal embedding table
               wconv_ref,     # VMEM (KCOLS, NCOLS)    consolidated conv weights
               biasmask_ref,  # VMEM (M_BLK, NCOLS)    conv bias where valid, -1e30 where invalid
               wfc_ref,       # VMEM (NCOLS, OUT_LANES)
               bfc_ref,       # VMEM (1, OUT_LANES)    fc bias, -1e30 on padded lanes
               out_ref):      # VMEM (BB, OUT_LANES)
    # Embedding gather + zero-pad + im2col: one MXU matmul (no scalar loops, no zero-init).
    lhs = jnp.dot(oh_ref[...], embbd_ref[...],
                  preferred_element_type=jnp.float32)                 # (M_BLK, 160)
    # All three window convolutions at every output position: one K=160 MXU matmul.
    acc = jnp.dot(lhs, wconv_ref[...],
                  preferred_element_type=jnp.float32)                 # (M_BLK, 384)
    # Bias + validity mask (precomputed constant) + ReLU: invalid positions become 0.
    conv = jnp.maximum(acc + biasmask_ref[...], 0.0)                  # (M_BLK, 384)
    # Global max-pool per sequence over tile-aligned 16-row blocks.
    pooled = jnp.max(conv.reshape(BB, STRIDE, NCOLS), axis=1)         # (BB, 384)
    # fc (N padded to 128 lanes) + softmax; padded lanes carry -1e30 bias -> probability 0.
    logits = jnp.dot(pooled, wfc_ref[...],
                     preferred_element_type=jnp.float32) + bfc_ref[...]
    m = jnp.max(logits, axis=-1, keepdims=True)
    e = jnp.exp(logits - m)
    out_ref[...] = e / jnp.sum(e, axis=-1, keepdims=True)


def _consolidate_params(params):
    """One-time, input-independent parameter consolidation into lane-dense slabs."""
    emb_table, conv_ws, conv_bs, fc_w, fc_b = params
    nw = len(WINDOWS)

    # Conv weights -> (5*E, 384); window ws is placed at taps k >= MAXW-ws so a shared 5-tap
    # conv over a PAD=4 left-padded sequence reproduces every window's padded conv.
    wconv = jnp.zeros((MAXW, EMBED, NCOLS), jnp.float32)
    for wi, (ws, cw) in enumerate(zip(WINDOWS, conv_ws)):
        wk = jnp.transpose(cw, (1, 2, 0))                             # (ws, E, 128)
        wconv = wconv.at[MAXW - ws:, :, wi * NCH:(wi + 1) * NCH].set(wk)
    wconv = wconv.reshape(MAXW * EMBED, NCOLS)                        # (160, 384)

    # Block-diagonal embedding table: tap k's vocab block maps to tap k's embed block.
    embbd = jnp.zeros((KDIM, KCOLS), jnp.float32)
    for k in range(MAXW):
        embbd = embbd.at[k * VOCAB:(k + 1) * VOCAB,
                         k * EMBED:(k + 1) * EMBED].set(emb_table)

    # Conv bias + validity mask folded into one constant slab (tiled over the BB sequences).
    # Window ws only has SEQ+ws-1 valid output positions; invalid rows get -1e30 (-> 0 post-ReLU).
    bcat = jnp.concatenate(conv_bs).reshape(1, NCOLS)                 # (1, 384)
    t = jnp.arange(STRIDE).reshape(STRIDE, 1)
    tvalid = jnp.concatenate(
        [jnp.full((1, NCH), SEQ + ws - 1, jnp.int32) for ws in WINDOWS], axis=1)
    biasmask = jnp.where(t < tvalid, bcat, jnp.float32(-1e30))        # (16, 384)
    biasmask = jnp.tile(biasmask, (BB, 1))                            # (128, 384)

    # fc: torch .view of (B,128,nw) flattens as c*nw + w; kernel's pooled order is w*128 + c.
    wfc = jnp.concatenate([fc_w[:, wi::nw] for wi in range(nw)], axis=1).T  # (384, 2)
    wfc_pad = jnp.zeros((NCOLS, OUT_LANES), jnp.float32).at[:, :NCLS].set(wfc)
    bfc_pad = jnp.full((1, OUT_LANES), -1e30, jnp.float32).at[0, :NCLS].set(fc_b)
    return embbd, wconv, biasmask, wfc_pad, bfc_pad


def _build_onehot(idx, bpad):
    """One-hot im2col selector: row b*STRIDE+t, column k*VOCAB+tok set iff conv tap k at output
    position t reads a real token (handles left/right zero padding and the 12..15 pad rows)."""
    b = idx.shape[0]
    idx_pad = jnp.zeros((bpad, SEQ), jnp.int32).at[:b].set(idx.astype(jnp.int32))
    tpos = jnp.arange(STRIDE)
    kpos = jnp.arange(MAXW)
    src = tpos[:, None] - PAD + kpos[None, :]                         # (16, 5) input positions
    valid = (src >= 0) & (src < SEQ) & (tpos[:, None] < T_OUT)        # (16, 5)
    src_c = jnp.clip(src, 0, SEQ - 1)
    tok = idx_pad[:, src_c]                                           # (bpad, 16, 5)
    col = kpos[None, None, :] * VOCAB + tok                           # (bpad, 16, 5) < 250
    oh = jax.nn.one_hot(col, KDIM, dtype=jnp.float32) * valid[None, :, :, None]
    return oh.sum(axis=2).reshape(bpad * STRIDE, KDIM)                # (bpad*16, 256)


def cnn_forward(idx, params):
    assert idx.shape[1] == SEQ
    b = idx.shape[0]
    nb = (b + BB - 1) // BB
    bpad = nb * BB

    embbd, wconv, biasmask, wfc_pad, bfc_pad = _consolidate_params(params)
    oh = _build_onehot(idx, bpad)

    out = pl.pallas_call(
        cnn_kernel,
        grid=(nb,),
        in_specs=[
            pl.BlockSpec((M_BLK, KDIM), lambda i: (i, 0)),            # activations: per-step block
            pl.BlockSpec((KDIM, KCOLS), lambda i: (0, 0)),            # weights: constant index_map
            pl.BlockSpec((KCOLS, NCOLS), lambda i: (0, 0)),           #   -> stay VMEM-resident
            pl.BlockSpec((M_BLK, NCOLS), lambda i: (0, 0)),
            pl.BlockSpec((NCOLS, OUT_LANES), lambda i: (0, 0)),
            pl.BlockSpec((1, OUT_LANES), lambda i: (0, 0)),
        ],
        out_specs=pl.BlockSpec((BB, OUT_LANES), lambda i: (i, 0)),    # lane-dense output store
        out_shape=jax.ShapeDtypeStruct((bpad, OUT_LANES), jnp.float32),
        compiler_params=pltpu.CompilerParams(dimension_semantics=("parallel",)),
    )(oh, embbd, wconv, biasmask, wfc_pad, bfc_pad)
    return out[:b, :NCLS]


def reference_forward(idx, params):
    """Pure-JAX replica of the PyTorch forward (for correctness check)."""
    emb_table, conv_ws, conv_bs, fc_w, fc_b = params
    batch = idx.shape[0]
    emb = emb_table[idx]                                              # (B, T, E)
    feats = []
    for ws, cw, cb in zip(WINDOWS, conv_ws, conv_bs):
        pad = ws - 1
        xp = jnp.pad(emb, ((0, 0), (pad, pad), (0, 0)))
        t_out = SEQ + ws - 1
        cols = []
        for t in range(t_out):
            win = xp[:, t:t + ws, :]                                  # (B, ws, E)
            cols.append(jnp.einsum('bke,cke->bc', win, cw) + cb)
        conv = jnp.maximum(jnp.stack(cols, axis=2), 0.0)              # (B, 128, t_out)
        feats.append(jnp.max(conv, axis=2, keepdims=True))            # (B, 128, 1)
    xcat = jnp.concatenate(feats, axis=2)                             # (B, 128, 3)
    flat = xcat.reshape(batch, -1)                                    # torch .view order: c*3 + w
    logits = flat @ fc_w.T + fc_b
    return jax.nn.softmax(logits, axis=-1)


def init_params():
    key = jax.random.PRNGKey(0)
    k_emb, k_cw, k_cb, k_fw, k_fb, _ = jax.random.split(key, 6)
    emb_table = jax.random.normal(k_emb, (VOCAB, EMBED), jnp.float32) * 0.1
    conv_ws, conv_bs = [], []
    cw_keys = jax.random.split(k_cw, len(WINDOWS))
    cb_keys = jax.random.split(k_cb, len(WINDOWS))
    for ws, kw_, kb_ in zip(WINDOWS, cw_keys, cb_keys):
        conv_ws.append(jax.random.normal(kw_, (NCH, ws, EMBED), jnp.float32) * 0.05)  # torch (C,1,ws,E) squeezed
        conv_bs.append(jax.random.normal(kb_, (NCH,), jnp.float32) * 0.05)
    fc_w = jax.random.normal(k_fw, (NCLS, NCH * len(WINDOWS)), jnp.float32) * 0.05    # torch (out, in)
    fc_b = jax.random.normal(k_fb, (NCLS,), jnp.float32) * 0.05
    return emb_table, conv_ws, conv_bs, fc_w, fc_b


if __name__ == "__main__":
    BATCH = 2
    params = init_params()
    idx_key = jax.random.split(jax.random.PRNGKey(0), 7)[-1]
    idx = jax.random.randint(idx_key, (BATCH, SEQ), 0, VOCAB, dtype=jnp.int32)

    probs = jax.block_until_ready(cnn_forward(idx, params))
    ref = reference_forward(idx, params)

    assert probs.shape == (BATCH, NCLS), probs.shape
    assert bool(jnp.all(jnp.isfinite(probs)))
    assert bool(jnp.allclose(probs, ref, atol=1e-3, rtol=1e-3)), (probs, ref)
    print("KERNEL_OK")
</pallas_src>

<mosaic_0001>
module attributes {stable_mosaic.version = 11 : i64} {
  func.func @cnn_kernel(%arg0: i32, %arg1: memref<128x256xf32, #tpu.memory_space<vmem>>, %arg2: memref<256x160xf32, #tpu.memory_space<vmem>>, %arg3: memref<160x384xf32, #tpu.memory_space<vmem>>, %arg4: memref<128x384xf32, #tpu.memory_space<vmem>>, %arg5: memref<384x128xf32, #tpu.memory_space<vmem>>, %arg6: memref<1x128xf32, #tpu.memory_space<vmem>>, %arg7: memref<8x128xf32, #tpu.memory_space<vmem>>) attributes {dimension_semantics = [#tpu.dimension_semantics<parallel>], iteration_bounds = array<i64: 1>, scalar_prefetch = 0 : i64, scratch_operands = 0 : i64, tpu.core_type = #tpu.core_type<tc>, window_params = [{transform_indices = @transform_0, window_bounds = array<i64: 128, 256>}, {pipeline_mode = #tpu.pipeline_mode<synchronous>, transform_indices = @transform_1, window_bounds = array<i64: 256, 160>}, {pipeline_mode = #tpu.pipeline_mode<synchronous>, transform_indices = @transform_2, window_bounds = array<i64: 160, 384>}, {pipeline_mode = #tpu.pipeline_mode<synchronous>, transform_indices = @transform_3, window_bounds = array<i64: 128, 384>}, {pipeline_mode = #tpu.pipeline_mode<synchronous>, transform_indices = @transform_4, window_bounds = array<i64: 384, 128>}, {pipeline_mode = #tpu.pipeline_mode<synchronous>, transform_indices = @transform_5, window_bounds = array<i64: 1, 128>}, {transform_indices = @transform_6, window_bounds = array<i64: 8, 128>}]} {
    %c0 = arith.constant 0 : index
    %c0_0 = arith.constant 0 : index
    %0 = vector.load %arg1[%c0, %c0_0] : memref<128x256xf32, #tpu.memory_space<vmem>>, vector<128x256xf32>
    %c0_1 = arith.constant 0 : index
    %c0_2 = arith.constant 0 : index
    %1 = vector.load %arg2[%c0_1, %c0_2] : memref<256x160xf32, #tpu.memory_space<vmem>>, vector<256x160xf32>
    %cst = arith.constant dense<0.000000e+00> : vector<128x160xf32>
    %2 = tpu.matmul %0, %1, %cst {dimension_numbers = #tpu.dot_dimension_numbers<[1], [0], [0], [1], [0, 0, 1, 1], [], []>} : vector<128x256xf32>, vector<256x160xf32>, vector<128x160xf32> -> vector<128x160xf32>
    %c0_3 = arith.constant 0 : index
    %c0_4 = arith.constant 0 : index
    %3 = vector.load %arg3[%c0_3, %c0_4] : memref<160x384xf32, #tpu.memory_space<vmem>>, vector<160x384xf32>
    %cst_5 = arith.constant dense<0.000000e+00> : vector<128x384xf32>
    %4 = tpu.matmul %2, %3, %cst_5 {dimension_numbers = #tpu.dot_dimension_numbers<[1], [0], [0], [1], [0, 0, 1, 1], [], []>} : vector<128x160xf32>, vector<160x384xf32>, vector<128x384xf32> -> vector<128x384xf32>
    %c0_6 = arith.constant 0 : index
    %c0_7 = arith.constant 0 : index
    %5 = vector.load %arg4[%c0_6, %c0_7] : memref<128x384xf32, #tpu.memory_space<vmem>>, vector<128x384xf32>
    %6 = arith.addf %4, %5 : vector<128x384xf32>
    %cst_8 = arith.constant 0.000000e+00 : f32
    %7 = vector.broadcast %cst_8 : f32 to vector<128x384xf32>
    %8 = arith.maximumf %6, %7 : vector<128x384xf32>
    %9 = vector.shape_cast %8 : vector<128x384xf32> to vector<8x16x384xf32>
    %cst_9 = arith.constant dense<0xFF800000> : vector<8x384xf32>
    %10 = vector.multi_reduction <maximumf>, %9, %cst_9 [1] : vector<8x16x384xf32> to vector<8x384xf32>
    %c0_10 = arith.constant 0 : index
    %c0_11 = arith.constant 0 : index
    %11 = vector.load %arg5[%c0_10, %c0_11] : memref<384x128xf32, #tpu.memory_space<vmem>>, vector<384x128xf32>
    %cst_12 = arith.constant dense<0.000000e+00> : vector<8x128xf32>
    %12 = tpu.matmul %10, %11, %cst_12 {dimension_numbers = #tpu.dot_dimension_numbers<[1], [0], [0], [1], [0, 0, 1, 1], [], []>} : vector<8x384xf32>, vector<384x128xf32>, vector<8x128xf32> -> vector<8x128xf32>
    %c0_13 = arith.constant 0 : index
    %c0_14 = arith.constant 0 : index
    %13 = vector.load %arg6[%c0_13, %c0_14] : memref<1x128xf32, #tpu.memory_space<vmem>>, vector<1x128xf32>
    %14 = vector.broadcast %13 : vector<1x128xf32> to vector<8x128xf32>
    %15 = arith.addf %12, %14 : vector<8x128xf32>
    %cst_15 = arith.constant dense<0xFF800000> : vector<8xf32>
    %16 = vector.multi_reduction <maximumf>, %15, %cst_15 [1] : vector<8x128xf32> to vector<8xf32>
    %17 = vector.shape_cast %16 : vector<8xf32> to vector<8x1xf32>
    %18 = vector.broadcast %17 : vector<8x1xf32> to vector<8x128xf32>
    %19 = arith.subf %15, %18 : vector<8x128xf32>
    %20 = math.exp %19 : vector<8x128xf32>
    %cst_16 = arith.constant dense<0.000000e+00> : vector<8xf32>
    %21 = vector.multi_reduction <add>, %20, %cst_16 [1] : vector<8x128xf32> to vector<8xf32>
    %22 = vector.shape_cast %21 : vector<8xf32> to vector<8x1xf32>
    %23 = vector.broadcast %22 : vector<8x1xf32> to vector<8x128xf32>
    %24 = arith.divf %20, %23 : vector<8x128xf32>
    %c0_17 = arith.constant 0 : index
    %c0_18 = arith.constant 0 : index
    %25 = vector.load %arg7[%c0_17, %c0_18] : memref<8x128xf32, #tpu.memory_space<vmem>>, vector<8x128xf32>
    tpu.vector_store %arg7[%c0_17, %c0_18], %24 {strides = array<i32>} : memref<8x128xf32, #tpu.memory_space<vmem>>, vector<8x128xf32>,
    return
  }
  func.func @transform_0(%arg0: i32) -> (i32, i32) {
    %c0_i32 = arith.constant 0 : i32
    %c0_i32_0 = arith.constant 0 : i32
    return %arg0, %c0_i32 : i32, i32
  }
  func.func @transform_1(%arg0: i32) -> (i32, i32) {
    %c0_i32 = arith.constant 0 : i32
    %c0_i32_0 = arith.constant 0 : i32
    %c0_i32_1 = arith.constant 0 : i32
    return %c0_i32, %c0_i32_0 : i32, i32
  }
  func.func @transform_2(%arg0: i32) -> (i32, i32) {
    %c0_i32 = arith.constant 0 : i32
    %c0_i32_0 = arith.constant 0 : i32
    %c0_i32_1 = arith.constant 0 : i32
    return %c0_i32, %c0_i32_0 : i32, i32
  }
  func.func @transform_3(%arg0: i32) -> (i32, i32) {
    %c0_i32 = arith.constant 0 : i32
    %c0_i32_0 = arith.constant 0 : i32
    %c0_i32_1 = arith.constant 0 : i32
    return %c0_i32, %c0_i32_0 : i32, i32
  }
  func.func @transform_4(%arg0: i32) -> (i32, i32) {
    %c0_i32 = arith.constant 0 : i32
    %c0_i32_0 = arith.constant 0 : i32
    %c0_i32_1 = arith.constant 0 : i32
    return %c0_i32, %c0_i32_0 : i32, i32
  }
  func.func @transform_5(%arg0: i32) -> (i32, i32) {
    %c0_i32 = arith.constant 0 : i32
    %c0_i32_0 = arith.constant 0 : i32
    %c0_i32_1 = arith.constant 0 : i32
    return %c0_i32, %c0_i32_0 : i32, i32
  }
  func.func @transform_6(%arg0: i32) -> (i32, i32) {
    %c0_i32 = arith.constant 0 : i32
    %c0_i32_0 = arith.constant 0 : i32
    return %arg0, %c0_i32 : i32, i32
  }
}

</mosaic_0001>

<llo_original>
// kernel: tpu_custom_call.1
$region0: #{tpu_custom_call.1}
  #allocation0 [shape = 'u32[]', space=smem, size = 0x4, offset = 0x4, fixed_abs, tag = 'smem constant byte address 0x4 - core index']
  #allocation1 [shape = 'u32[144,128]{1,0:T(1,128)}', space=vmem, size = 0x12000, scoped, tag = 'internal scratch']
  %s0 = inlined_call_operand.vmem [shape: f32[128,256], index: 0, kind: input, shape index: {}]
  %s1 = inlined_call_operand.vmem [shape: f32[256,160], index: 1, kind: input, shape index: {}]
  %s2 = inlined_call_operand.vmem [shape: f32[160,384], index: 2, kind: input, shape index: {}]
  %s3 = inlined_call_operand.hbm [shape: f32[128,384], index: 3, kind: input, shape index: {}]
  %s4 = inlined_call_operand.hbm [shape: f32[384,128], index: 4, kind: input, shape index: {}]
  %s5 = inlined_call_operand.vmem [shape: f32[1,128], index: 5, kind: input, shape index: {}]
  %s6 = inlined_call_operand.hbm [shape: f32[8,128], index: 6, kind: output, shape index: {}]
  %s7 = sld [smem:[#allocation0]]
  $region42: #{tpu_custom_call.1} parent=0
    _
  %s9 = ssub.s32 1, %s7
  %s10 = scalar_select 0, %s9, %s7
  $region1: #{tpu_custom_call.1} parent=0
    #allocation2 [shape = 'u8[196608]{0}', space=vmem, size = 0x30000, scoped, tag = 'input window, operand 3, single buffered']
    #allocation3 [shape = 's32[1]{0}', space=sflag, size = 0x4, scoped, tag = 'scoped memory for tpu_custom_call.1']
    #allocation4 [shape = 's32[1]{0}', space=sflag, size = 0x4, scoped, tag = 'scoped memory for tpu_custom_call.1']
    #allocation5 [shape = 'u8[196608]{0}', space=vmem, size = 0x30000, scoped, tag = 'input window, operand 4, single buffered']
    #allocation6 [shape = 's32[1]{0}', space=sflag, size = 0x4, scoped, tag = 'scoped memory for tpu_custom_call.1']
    #allocation7 [shape = 'u8[4096]{0}', space=vmem, size = 0x1000, scoped, tag = 'output window, operand 0, single buffered']
    %11 = vsyncpa [#allocation3], 0
    %12 = vsyncpa [#allocation6], 0
    %13 = vsyncpa [#allocation4], 0
    // Predicated region
    $region2: #{tpu_custom_call.1} parent=1 // pred_check
      _
    $region3: #{tpu_custom_call.1} parent=1 // pred_check_branch
      %15 = sbr.rel (0) target = $region5
    $region4: #{tpu_custom_call.1} parent=1 // pred_region
      _
    $region5: #{tpu_custom_call.1} parent=1 // pred_fallthru
      _
    // Predicated region
    $region6: #{tpu_custom_call.1} parent=1 // pred_check
      _
    $region7: #{tpu_custom_call.1} parent=1 // pred_check_branch
      %17 = sbr.rel (0) target = $region9
    $region8: #{tpu_custom_call.1} parent=1 // pred_region
      _
    $region9: #{tpu_custom_call.1} parent=1 // pred_fallthru
      _
    // Predicated region
    $region10: #{tpu_custom_call.1} parent=1 // pred_check
      _
    $region11: #{tpu_custom_call.1} parent=1 // pred_check_branch
      %19 = sbr.rel (0) target = $region13
    $region12: #{tpu_custom_call.1} parent=1 // pred_region
      _
    $region13: #{tpu_custom_call.1} parent=1 // pred_fallthru
      _
    // Predicated region
    $region14: #{tpu_custom_call.1} parent=1 // pred_check
      _
    $region15: #{tpu_custom_call.1} parent=1 // pred_check_branch
      %21 = sbr.rel (0) target = $region17
    $region16: #{tpu_custom_call.1} parent=1 // pred_region
      %s23 = ssub.s32 6144, 6144
      %24 = vsyncadd [#allocation3], %s23
      %s25 = sshll.u32 [#allocation2], 4
      %s26 = int_to_ptr.vmem [resolvable:$true] %s25
      %31 = dma.hbm_to_vmem [thread:$0]  %s3, 6144, %s26, [#allocation3], 384, 384, 24
    $region17: #{tpu_custom_call.1} parent=1 // pred_fallthru
      _
    // Predicated region
    $region18: #{tpu_custom_call.1} parent=1 // pred_check
      _
    $region19: #{tpu_custom_call.1} parent=1 // pred_check_branch
      %33 = sbr.rel (0) target = $region21
    $region20: #{tpu_custom_call.1} parent=1 // pred_region
      %s35 = ssub.s32 6144, 6144
      %36 = vsyncadd [#allocation6], %s35
      %s37 = sshll.u32 [#allocation5], 4
      %s38 = int_to_ptr.vmem [resolvable:$true] %s37
      %43 = dma.hbm_to_vmem [thread:$0]  %s4, 6144, %s38, [#allocation6], 128, 128, 8
    $region21: #{tpu_custom_call.1} parent=1 // pred_fallthru
      _
    // Predicated region
    $region22: #{tpu_custom_call.1} parent=1 // pred_check
      _
    $region23: #{tpu_custom_call.1} parent=1 // pred_check_branch
      %45 = sbr.rel (0) target = $region25
    $region24: #{tpu_custom_call.1} parent=1 // pred_region
      _
    $region25: #{tpu_custom_call.1} parent=1 // pred_fallthru
      _
    // Predicated region
    $region26: #{tpu_custom_call.1} parent=1 // pred_check
      _
    $region27: #{tpu_custom_call.1} parent=1 // pred_check_branch
      %47 = sbr.rel (0) target = $region29
    $region28: #{tpu_custom_call.1} parent=1 // pred_region
      %48 = dma.done [#allocation3], 6144
    $region29: #{tpu_custom_call.1} parent=1 // pred_fallthru
      _
    // Predicated region
    $region30: #{tpu_custom_call.1} parent=1 // pred_check
      _
    $region31: #{tpu_custom_call.1} parent=1 // pred_check_branch
      %50 = sbr.rel (0) target = $region33
    $region32: #{tpu_custom_call.1} parent=1 // pred_region
      %51 = dma.done [#allocation6], 6144
    $region33: #{tpu_custom_call.1} parent=1 // pred_fallthru
      _
    %v52 = vld [vmem:[%s0] sm:$0xff]
    %v53 = vld [vmem:[%s0 + $0x8] sm:$0xff]
    %v54 = vld [vmem:[%s0 + $0x10] sm:$0xff]
    %v55 = vld [vmem:[%s0 + $0x18] sm:$0xff]
    %v56 = vld [vmem:[%s0 + $0x20] sm:$0xff]
    %v57 = vld [vmem:[%s0 + $0x28] sm:$0xff]
    %v58 = vld [vmem:[%s0 + $0x30] sm:$0xff]
    %v59 = vld [vmem:[%s0 + $0x38] sm:$0xff]
    %v60 = vld [vmem:[%s0 + $0x40] sm:$0xff]
    %v61 = vld [vmem:[%s0 + $0x48] sm:$0xff]
    %v62 = vld [vmem:[%s0 + $0x50] sm:$0xff]
    %v63 = vld [vmem:[%s0 + $0x58] sm:$0xff]
    %v64 = vld [vmem:[%s0 + $0x60] sm:$0xff]
    %v65 = vld [vmem:[%s0 + $0x68] sm:$0xff]
    %v66 = vld [vmem:[%s0 + $0x70] sm:$0xff]
    %v67 = vld [vmem:[%s0 + $0x78] sm:$0xff]
    %v68 = vld [vmem:[%s0 + $0x80] sm:$0xff]
    %v69 = vld [vmem:[%s0 + $0x88] sm:$0xff]
    %v70 = vld [vmem:[%s0 + $0x90] sm:$0xff]
    %v71 = vld [vmem:[%s0 + $0x98] sm:$0xff]
    %v72 = vld [vmem:[%s0 + $0xa0] sm:$0xff]
    %v73 = vld [vmem:[%s0 + $0xa8] sm:$0xff]
    %v74 = vld [vmem:[%s0 + $0xb0] sm:$0xff]
    %v75 = vld [vmem:[%s0 + $0xb8] sm:$0xff]
    %v76 = vld [vmem:[%s0 + $0xc0] sm:$0xff]
    %v77 = vld [vmem:[%s0 + $0xc8] sm:$0xff]
    %v78 = vld [vmem:[%s0 + $0xd0] sm:$0xff]
    %v79 = vld [vmem:[%s0 + $0xd8] sm:$0xff]
    %v80 = vld [vmem:[%s0 + $0xe0] sm:$0xff]
    %v81 = vld [vmem:[%s0 + $0xe8] sm:$0xff]
    %v82 = vld [vmem:[%s0 + $0xf0] sm:$0xff]
    %v83 = vld [vmem:[%s0 + $0xf8] sm:$0xff]
    %v84 = vld [vmem:[%s1] sm:$0xff]
    %v85 = vld [vmem:[%s1 + $0x8] sm:$0xff]
    %v86 = vld [vmem:[%s1 + $0x10] sm:$0xff]
    %v87 = vld [vmem:[%s1 + $0x18] sm:$0xff]
    %v88 = vld [vmem:[%s1 + $0x20] sm:$0xff]
    %v89 = vld [vmem:[%s1 + $0x28] sm:$0xff]
    %v90 = vld [vmem:[%s1 + $0x30] sm:$0xff]
    %v91 = vld [vmem:[%s1 + $0x38] sm:$0xff]
    %v92 = vld [vmem:[%s1 + $0x40] sm:$0xff]
    %v93 = vld [vmem:[%s1 + $0x48] sm:$0xff]
    %v94 = vld [vmem:[%s1 + $0x50] sm:$0xff]
    %v95 = vld [vmem:[%s1 + $0x58] sm:$0xff]
    %v96 = vld [vmem:[%s1 + $0x60] sm:$0xff]
    %v97 = vld [vmem:[%s1 + $0x68] sm:$0xff]
    %v98 = vld [vmem:[%s1 + $0x70] sm:$0xff]
    %v99 = vld [vmem:[%s1 + $0x78] sm:$0xff]
    %v100 = vld [vmem:[%s1 + $0x80] sm:$0xff]
    %v101 = vld [vmem:[%s1 + $0x88] sm:$0xff]
    %v102 = vld [vmem:[%s1 + $0x90] sm:$0xff]
    %v103 = vld [vmem:[%s1 + $0x98] sm:$0xff]
    %v104 = vld [vmem:[%s1 + $0xa0] sm:$0xff]
    %v105 = vld [vmem:[%s1 + $0xa8] sm:$0xff]
    %v106 = vld [vmem:[%s1 + $0xb0] sm:$0xff]
    %v107 = vld [vmem:[%s1 + $0xb8] sm:$0xff]
    %v108 = vld [vmem:[%s1 + $0xc0] sm:$0xff]
    %v109 = vld [vmem:[%s1 + $0xc8] sm:$0xff]
    %v110 = vld [vmem:[%s1 + $0xd0] sm:$0xff]
    %v111 = vld [vmem:[%s1 + $0xd8] sm:$0xff]
    %v112 = vld [vmem:[%s1 + $0xe0] sm:$0xff]
    %v113 = vld [vmem:[%s1 + $0xe8] sm:$0xff]
    %v114 = vld [vmem:[%s1 + $0xf0] sm:$0xff]
    %v115 = vld [vmem:[%s1 + $0xf8] sm:$0xff]
    %v116 = vld [vmem:[%s1 + $0x100] sm:$0xff]
    %v117 = vld [vmem:[%s1 + $0x108] sm:$0xff]
    %v118 = vld [vmem:[%s1 + $0x110] sm:$0xff]
    %v119 = vld [vmem:[%s1 + $0x118] sm:$0xff]
    %v120 = vld [vmem:[%s1 + $0x120] sm:$0xff]
    %v121 = vld [vmem:[%s1 + $0x128] sm:$0xff]
    %v122 = vld [vmem:[%s1 + $0x130] sm:$0xff]
    %v123 = vld [vmem:[%s1 + $0x138] sm:$0xff]
    %v124 = vld [vmem:[%s1 + $0x140] sm:$0xff]
    %v125 = vld [vmem:[%s1 + $0x148] sm:$0xff]
    %v126 = vld [vmem:[%s1 + $0x150] sm:$0xff]
    %v127 = vld [vmem:[%s1 + $0x158] sm:$0xff]
    %v128 = vld [vmem:[%s1 + $0x160] sm:$0xff]
    %v129 = vld [vmem:[%s1 + $0x168] sm:$0xff]
    %v130 = vld [vmem:[%s1 + $0x170] sm:$0xff]
    %v131 = vld [vmem:[%s1 + $0x178] sm:$0xff]
    %v132 = vld [vmem:[%s1 + $0x180] sm:$0xff]
    %v133 = vld [vmem:[%s1 + $0x188] sm:$0xff]
    %v134 = vld [vmem:[%s1 + $0x190] sm:$0xff]
    %v135 = vld [vmem:[%s1 + $0x198] sm:$0xff]
    %v136 = vld [vmem:[%s1 + $0x1a0] sm:$0xff]
    %v137 = vld [vmem:[%s1 + $0x1a8] sm:$0xff]
    %v138 = vld [vmem:[%s1 + $0x1b0] sm:$0xff]
    %v139 = vld [vmem:[%s1 + $0x1b8] sm:$0xff]
    %v140 = vld [vmem:[%s1 + $0x1c0] sm:$0xff]
    %v141 = vld [vmem:[%s1 + $0x1c8] sm:$0xff]
    %v142 = vld [vmem:[%s1 + $0x1d0] sm:$0xff]
    %v143 = vld [vmem:[%s1 + $0x1d8] sm:$0xff]
    %v144 = vld [vmem:[%s1 + $0x1e0] sm:$0xff]
    %v145 = vld [vmem:[%s1 + $0x1e8] sm:$0xff]
    %v146 = vld [vmem:[%s1 + $0x1f0] sm:$0xff]
    %v147 = vld [vmem:[%s1 + $0x1f8] sm:$0xff]
    %148 = vmatprep.subr.mxu0 %v115
    %149 = vmatpush1.msra.mxu0 %v114
    %150 = vmatprep.subr.mxu0 %v113
    %151 = vmatpush1.msra.mxu0 %v112
    %152 = vmatprep.subr.mxu0 %v111
    %153 = vmatpush1.msra.mxu0 %v110
    %154 = vmatprep.subr.mxu0 %v109
    %155 = vmatpush1.msra.mxu0 %v108
    %156 = vmatprep.subr.mxu0 %v107
    %157 = vmatpush1.msra.mxu0 %v106
    %158 = vmatprep.subr.mxu0 %v105
    %159 = vmatpush1.msra.mxu0 %v104
    %160 = vmatprep.subr.mxu0 %v103
    %161 = vmatpush1.msra.mxu0 %v102
    %162 = vmatprep.subr.mxu0 %v101
    %163 = vmatpush1.msra.mxu0 %v100
    %164 = vmatprep.subr.mxu0 %v99
    %165 = vmatpush1.msra.mxu0 %v98
    %166 = vmatprep.subr.mxu0 %v97
    %167 = vmatpush1.msra.mxu0 %v96
    %168 = vmatprep.subr.mxu0 %v95
    %169 = vmatpush1.msra.mxu0 %v94
    %170 = vmatprep.subr.mxu0 %v93
    %171 = vmatpush1.msra.mxu0 %v92
    %172 = vmatprep.subr.mxu0 %v91
    %173 = vmatpush1.msra.mxu0 %v90
    %174 = vmatprep.subr.mxu0 %v89
    %175 = vmatpush1.msra.mxu0 %v88
    %176 = vmatprep.subr.mxu0 %v87
    %177 = vmatpush1.msra.mxu0 %v86
    %178 = vmatprep.subr.mxu0 %v85
    %179 = vmatpush1.msra.mxu0 %v84
    %180 = vmatprep.subr.mxu0 %v147
    %181 = vmatpush2.msra.mxu0 %v146
    %182 = vmatprep.subr.mxu0 %v145
    %183 = vmatpush2.msra.mxu0 %v144
    %184 = vmatprep.subr.mxu0 %v143
    %185 = vmatpush2.msra.mxu0 %v142
    %186 = vmatprep.subr.mxu0 %v141
    %187 = vmatpush2.msra.mxu0 %v140
    %188 = vmatprep.subr.mxu0 %v139
    %189 = vmatpush2.msra.mxu0 %v138
    %190 = vmatprep.subr.mxu0 %v137
    %191 = vmatpush2.msra.mxu0 %v136
    %192 = vmatprep.subr.mxu0 %v135
    %193 = vmatpush2.msra.mxu0 %v134
    %194 = vmatprep.subr.mxu0 %v133
    %195 = vmatpush2.msra.mxu0 %v132
    %196 = vmatprep.subr.mxu0 %v131
    %197 = vmatpush2.msra.mxu0 %v130
    %198 = vmatprep.subr.mxu0 %v129
    %199 = vmatpush2.msra.mxu0 %v128
    %200 = vmatprep.subr.mxu0 %v127
    %201 = vmatpush2.msra.mxu0 %v126
    %202 = vmatprep.subr.mxu0 %v125
    %203 = vmatpush2.msra.mxu0 %v124
    %204 = vmatprep.subr.mxu0 %v123
    %205 = vmatpush2.msra.mxu0 %v122
    %206 = vmatprep.subr.mxu0 %v121
    %207 = vmatpush2.msra.mxu0 %v120
    %208 = vmatprep.subr.mxu0 %v119
    %209 = vmatpush2.msra.mxu0 %v118
    %210 = vmatprep.subr.mxu0 %v117
    %211 = vmatpush2.msra.mxu0 %v116
    %212 = vmatprep.mubr.f32.mxu0 %v53
    %213 = vmatmul.mubr.f32.gmra.mxu0 %v52
    %v214 = vpop.f32.mrf.mxu0
    %v215 = vadd.f32 0.0, %v214
    %v216 = vpop.f32.mrf.mxu0
    %v217 = vadd.f32 0.0, %v216
    %218 = vmatprep.mubr.f32.mxu0 %v55
    %219 = vmatmul.mubr.f32.gmra.mxu0 %v54
    %v220 = vpop.f32.mrf.mxu0
    %v221 = vadd.f32 0.0, %v220
    %v222 = vpop.f32.mrf.mxu0
    %v223 = vadd.f32 0.0, %v222
    %224 = vmatprep.mubr.f32.mxu0 %v57
    %225 = vmatmul.mubr.f32.gmra.mxu0 %v56
    %v226 = vpop.f32.mrf.mxu0
    %v227 = vadd.f32 0.0, %v226
    %v228 = vpop.f32.mrf.mxu0
    %v229 = vadd.f32 0.0, %v228
    %230 = vmatprep.mubr.f32.mxu0 %v59
    %231 = vmatmul.mubr.f32.gmra.mxu0 %v58
    %v232 = vpop.f32.mrf.mxu0
    %v233 = vadd.f32 0.0, %v232
    %v234 = vpop.f32.mrf.mxu0
    %v235 = vadd.f32 0.0, %v234
    %236 = vmatprep.mubr.f32.mxu0 %v61
    %237 = vmatmul.mubr.f32.gmra.mxu0 %v60
    %v238 = vpop.f32.mrf.mxu0
    %v239 = vadd.f32 0.0, %v238
    %v240 = vpop.f32.mrf.mxu0
    %v241 = vadd.f32 0.0, %v240
    %242 = vmatprep.mubr.f32.mxu0 %v63
    %243 = vmatmul.mubr.f32.gmra.mxu0 %v62
    %v244 = vpop.f32.mrf.mxu0
    %v245 = vadd.f32 0.0, %v244
    %v246 = vpop.f32.mrf.mxu0
    %v247 = vadd.f32 0.0, %v246
    %248 = vmatprep.mubr.f32.mxu0 %v65
    %249 = vmatmul.mubr.f32.gmra.mxu0 %v64
    %v250 = vpop.f32.mrf.mxu0
    %v251 = vadd.f32 0.0, %v250
    %v252 = vpop.f32.mrf.mxu0
    %v253 = vadd.f32 0.0, %v252
    %254 = vmatprep.mubr.f32.mxu0 %v67
    %255 = vmatmul.mubr.f32.gmra.mxu0 %v66
    %v256 = vpop.f32.mrf.mxu0
    %v257 = vadd.f32 0.0, %v256
    %v258 = vpop.f32.mrf.mxu0
    %v259 = vadd.f32 0.0, %v258
    %260 = vmatprep.mubr.f32.mxu0 %v69
    %261 = vmatmul.mubr.f32.gmra.mxu0 %v68
    %v262 = vpop.f32.mrf.mxu0
    %v263 = vadd.f32 0.0, %v262
    %v264 = vpop.f32.mrf.mxu0
    %v265 = vadd.f32 0.0, %v264
    %266 = vmatprep.mubr.f32.mxu0 %v71
    %267 = vmatmul.mubr.f32.gmra.mxu0 %v70
    %v268 = vpop.f32.mrf.mxu0
    %v269 = vadd.f32 0.0, %v268
    %v270 = vpop.f32.mrf.mxu0
    %v271 = vadd.f32 0.0, %v270
    %272 = vmatprep.mubr.f32.mxu0 %v73
    %273 = vmatmul.mubr.f32.gmra.mxu0 %v72
    %v274 = vpop.f32.mrf.mxu0
    %v275 = vadd.f32 0.0, %v274
    %v276 = vpop.f32.mrf.mxu0
    %v277 = vadd.f32 0.0, %v276
    %278 = vmatprep.mubr.f32.mxu0 %v75
    %279 = vmatmul.mubr.f32.gmra.mxu0 %v74
    %v280 = vpop.f32.mrf.mxu0
    %v281 = vadd.f32 0.0, %v280
    %v282 = vpop.f32.mrf.mxu0
    %v283 = vadd.f32 0.0, %v282
    %284 = vmatprep.mubr.f32.mxu0 %v77
    %285 = vmatmul.mubr.f32.gmra.mxu0 %v76
    %v286 = vpop.f32.mrf.mxu0
    %v287 = vadd.f32 0.0, %v286
    %v288 = vpop.f32.mrf.mxu0
    %v289 = vadd.f32 0.0, %v288
    %290 = vmatprep.mubr.f32.mxu0 %v79
    %291 = vmatmul.mubr.f32.gmra.mxu0 %v78
    %v292 = vpop.f32.mrf.mxu0
    %v293 = vadd.f32 0.0, %v292
    %v294 = vpop.f32.mrf.mxu0
    %v295 = vadd.f32 0.0, %v294
    %296 = vmatprep.mubr.f32.mxu0 %v81
    %297 = vmatmul.mubr.f32.gmra.mxu0 %v80
    %v298 = vpop.f32.mrf.mxu0
    %v299 = vadd.f32 0.0, %v298
    %v300 = vpop.f32.mrf.mxu0
    %v301 = vadd.f32 0.0, %v300
    %302 = vmatprep.mubr.f32.mxu0 %v83
    %303 = vmatmul.mubr.f32.gmra.mxu0 %v82
    %v304 = vpop.f32.mrf.mxu0
    %v305 = vadd.f32 0.0, %v304
    %v306 = vpop.f32.mrf.mxu0
    %v307 = vadd.f32 0.0, %v306
    %308 = vdwg.mxu0
    %v309 = vld [vmem:[%s2] sm:$0xff]
    %v310 = vld [vmem:[%s2 + $0x8] sm:$0xff]
    %v311 = vld [vmem:[%s2 + $0x10] sm:$0xff]
    %v312 = vld [vmem:[%s2 + $0x18] sm:$0xff]
    %v313 = vld [vmem:[%s2 + $0x20] sm:$0xff]
    %v314 = vld [vmem:[%s2 + $0x28] sm:$0xff]
    %v315 = vld [vmem:[%s2 + $0x30] sm:$0xff]
    %v316 = vld [vmem:[%s2 + $0x38] sm:$0xff]
    %v317 = vld [vmem:[%s2 + $0x40] sm:$0xff]
    %v318 = vld [vmem:[%s2 + $0x48] sm:$0xff]
    %v319 = vld [vmem:[%s2 + $0x50] sm:$0xff]
    %v320 = vld [vmem:[%s2 + $0x58] sm:$0xff]
    %v321 = vld [vmem:[%s2 + $0x60] sm:$0xff]
    %v322 = vld [vmem:[%s2 + $0x68] sm:$0xff]
    %v323 = vld [vmem:[%s2 + $0x70] sm:$0xff]
    %v324 = vld [vmem:[%s2 + $0x78] sm:$0xff]
    %v325 = vld [vmem:[%s2 + $0x80] sm:$0xff]
    %v326 = vld [vmem:[%s2 + $0x88] sm:$0xff]
    %v327 = vld [vmem:[%s2 + $0x90] sm:$0xff]
    %v328 = vld [vmem:[%s2 + $0x98] sm:$0xff]
    %v329 = vld [vmem:[%s2 + $0xa0] sm:$0xff]
    %v330 = vld [vmem:[%s2 + $0xa8] sm:$0xff]
    %v331 = vld [vmem:[%s2 + $0xb0] sm:$0xff]
    %v332 = vld [vmem:[%s2 + $0xb8] sm:$0xff]
    %v333 = vld [vmem:[%s2 + $0xc0] sm:$0xff]
    %v334 = vld [vmem:[%s2 + $0xc8] sm:$0xff]
    %v335 = vld [vmem:[%s2 + $0xd0] sm:$0xff]
    %v336 = vld [vmem:[%s2 + $0xd8] sm:$0xff]
    %v337 = vld [vmem:[%s2 + $0xe0] sm:$0xff]
    %v338 = vld [vmem:[%s2 + $0xe8] sm:$0xff]
    %v339 = vld [vmem:[%s2 + $0xf0] sm:$0xff]
    %v340 = vld [vmem:[%s2 + $0xf8] sm:$0xff]
    %v341 = vld [vmem:[%s2 + $0x100] sm:$0xff]
    %v342 = vld [vmem:[%s2 + $0x108] sm:$0xff]
    %v343 = vld [vmem:[%s2 + $0x110] sm:$0xff]
    %v344 = vld [vmem:[%s2 + $0x118] sm:$0xff]
    %v345 = vld [vmem:[%s2 + $0x120] sm:$0xff]
    %v346 = vld [vmem:[%s2 + $0x128] sm:$0xff]
    %v347 = vld [vmem:[%s2 + $0x130] sm:$0xff]
    %v348 = vld [vmem:[%s2 + $0x138] sm:$0xff]
    %v349 = vld [vmem:[%s2 + $0x140] sm:$0xff]
    %v350 = vld [vmem:[%s2 + $0x148] sm:$0xff]
    %v351 = vld [vmem:[%s2 + $0x150] sm:$0xff]
    %v352 = vld [vmem:[%s2 + $0x158] sm:$0xff]
    %v353 = vld [vmem:[%s2 + $0x160] sm:$0xff]
    %v354 = vld [vmem:[%s2 + $0x168] sm:$0xff]
    %v355 = vld [vmem:[%s2 + $0x170] sm:$0xff]
    %v356 = vld [vmem:[%s2 + $0x178] sm:$0xff]
    %v357 = vld [vmem:[%s2 + $0x180] sm:$0xff]
    %v358 = vld [vmem:[%s2 + $0x188] sm:$0xff]
    %v359 = vld [vmem:[%s2 + $0x190] sm:$0xff]
    %v360 = vld [vmem:[%s2 + $0x198] sm:$0xff]
    %v361 = vld [vmem:[%s2 + $0x1a0] sm:$0xff]
    %v362 = vld [vmem:[%s2 + $0x1a8] sm:$0xff]
    %v363 = vld [vmem:[%s2 + $0x1b0] sm:$0xff]
    %v364 = vld [vmem:[%s2 + $0x1b8] sm:$0xff]
    %v365 = vld [vmem:[%s2 + $0x1c0] sm:$0xff]
    %v366 = vld [vmem:[%s2 + $0x1c8] sm:$0xff]
    %v367 = vld [vmem:[%s2 + $0x1d0] sm:$0xff]
    %v368 = vld [vmem:[%s2 + $0x1d8] sm:$0xff]
    %v369 = vld [vmem:[#allocation2] sm:$0xff]
    %v370 = vld [vmem:[#allocation2 + $0x8] sm:$0xff]
    %v371 = vld [vmem:[#allocation2 + $0x10] sm:$0xff]
    %v372 = vld [vmem:[#allocation2 + $0x18] sm:$0xff]
    %v373 = vld [vmem:[#allocation2 + $0x20] sm:$0xff]
    %v374 = vld [vmem:[#allocation2 + $0x28] sm:$0xff]
    %v375 = vld [vmem:[#allocation2 + $0x30] sm:$0xff]
    %v376 = vld [vmem:[#allocation2 + $0x38] sm:$0xff]
    %v377 = vld [vmem:[#allocation2 + $0x40] sm:$0xff]
    %v378 = vld [vmem:[#allocation2 + $0x48] sm:$0xff]
    %v379 = vld [vmem:[#allocation2 + $0x50] sm:$0xff]
    %v380 = vld [vmem:[#allocation2 + $0x58] sm:$0xff]
    %v381 = vld [vmem:[#allocation2 + $0x60] sm:$0xff]
    %v382 = vld [vmem:[#allocation2 + $0x68] sm:$0xff]
    %v383 = vld [vmem:[#allocation2 + $0x70] sm:$0xff]
    %v384 = vld [vmem:[#allocation2 + $0x78] sm:$0xff]
    %v385 = vld [vmem:[#allocation2 + $0x80] sm:$0xff]
    %v386 = vld [vmem:[#allocation2 + $0x88] sm:$0xff]
    %v387 = vld [vmem:[#allocation2 + $0x90] sm:$0xff]
    %v388 = vld [vmem:[#allocation2 + $0x98] sm:$0xff]
    %v389 = vld [vmem:[#allocation2 + $0xa0] sm:$0xff]
    %v390 = vld [vmem:[#allocation2 + $0xa8] sm:$0xff]
    %v391 = vld [vmem:[#allocation2 + $0xb0] sm:$0xff]
    %v392 = vld [vmem:[#allocation2 + $0xb8] sm:$0xff]
    %v393 = vld [vmem:[#allocation2 + $0xc0] sm:$0xff]
    %v394 = vld [vmem:[#allocation2 + $0xc8] sm:$0xff]
    %v395 = vld [vmem:[#allocation2 + $0xd0] sm:$0xff]
    %v396 = vld [vmem:[#allocation2 + $0xd8] sm:$0xff]
    %v397 = vld [vmem:[#allocation2 + $0xe0] sm:$0xff]
    %v398 = vld [vmem:[#allocation2 + $0xe8] sm:$0xff]
    %v399 = vld [vmem:[#allocation2 + $0xf0] sm:$0xff]
    %v400 = vld [vmem:[#allocation2 + $0xf8] sm:$0xff]
    %v401 = vld [vmem:[#allocation2 + $0x100] sm:$0xff]
    %v402 = vld [vmem:[#allocation2 + $0x108] sm:$0xff]
    %v403 = vld [vmem:[#allocation2 + $0x110] sm:$0xff]
    %v404 = vld [vmem:[#allocation2 + $0x118] sm:$0xff]
    %v405 = vld [vmem:[#allocation2 + $0x120] sm:$0xff]
    %v406 = vld [vmem:[#allocation2 + $0x128] sm:$0xff]
    %v407 = vld [vmem:[#allocation2 + $0x130] sm:$0xff]
    %v408 = vld [vmem:[#allocation2 + $0x138] sm:$0xff]
    %v409 = vld [vmem:[#allocation2 + $0x140] sm:$0xff]
    %v410 = vld [vmem:[#allocation2 + $0x148] sm:$0xff]
    %v411 = vld [vmem:[#allocation2 + $0x150] sm:$0xff]
    %v412 = vld [vmem:[#allocation2 + $0x158] sm:$0xff]
    %v413 = vld [vmem:[#allocation2 + $0x160] sm:$0xff]
    %v414 = vld [vmem:[#allocation2 + $0x168] sm:$0xff]
    %v415 = vld [vmem:[#allocation2 + $0x170] sm:$0xff]
    %v416 = vld [vmem:[#allocation2 + $0x178] sm:$0xff]
    %vm417 = vcmask 261120
    %v419 = vsel %vm417, %v217, 0
    %v422 = vsel %vm417, %v223, 0
    %v425 = vsel %vm417, %v229, 0
    %v428 = vsel %vm417, %v235, 0
    %v431 = vsel %vm417, %v241, 0
    %v434 = vsel %vm417, %v247, 0
    %v437 = vsel %vm417, %v253, 0
    %v440 = vsel %vm417, %v259, 0
    %v443 = vsel %vm417, %v265, 0
    %v446 = vsel %vm417, %v271, 0
    %v449 = vsel %vm417, %v277, 0
    %v452 = vsel %vm417, %v283, 0
    %v455 = vsel %vm417, %v289, 0
    %v458 = vsel %vm417, %v295, 0
    %v461 = vsel %vm417, %v301, 0
    %v464 = vsel %vm417, %v307, 0
    %466 = vmatprep.subr.mxu0 %v355
    %467 = vmatpush1.msra.mxu0 %v354
    %468 = vmatprep.subr.mxu0 %v352
    %469 = vmatpush1.msra.mxu0 %v351
    %470 = vmatprep.subr.mxu0 %v349
    %471 = vmatpush1.msra.mxu0 %v348
    %472 = vmatprep.subr.mxu0 %v346
    %473 = vmatpush1.msra.mxu0 %v345
    %474 = vmatprep.subr.mxu0 %v343
    %475 = vmatpush1.msra.mxu0 %v342
    %476 = vmatprep.subr.mxu0 %v340
    %477 = vmatpush1.msra.mxu0 %v339
    %478 = vmatprep.subr.mxu0 %v337
    %479 = vmatpush1.msra.mxu0 %v336
    %480 = vmatprep.subr.mxu0 %v334
    %481 = vmatpush1.msra.mxu0 %v333
    %482 = vmatprep.subr.mxu0 %v331
    %483 = vmatpush1.msra.mxu0 %v330
    %484 = vmatprep.subr.mxu0 %v328
    %485 = vmatpush1.msra.mxu0 %v327
    %486 = vmatprep.subr.mxu0 %v325
    %487 = vmatpush1.msra.mxu0 %v324
    %488 = vmatprep.subr.mxu0 %v322
    %489 = vmatpush1.msra.mxu0 %v321
    %490 = vmatprep.subr.mxu0 %v319
    %491 = vmatpush1.msra.mxu0 %v318
    %492 = vmatprep.subr.mxu0 %v316
    %493 = vmatpush1.msra.mxu0 %v315
    %494 = vmatprep.subr.mxu0 %v313
    %495 = vmatpush1.msra.mxu0 %v312
    %496 = vmatprep.subr.mxu0 %v310
    %497 = vmatpush1.msra.mxu0 %v309
    %498 = vmatprep.subr.mxu0 0.0
    %499 = vmatpush2.msra.mxu0 0.0
    %500 = vmatprep.subr.mxu0 0.0
    %501 = vmatpush2.msra.mxu0 0.0
    %502 = vmatprep.subr.mxu0 0.0
    %503 = vmatpush2.msra.mxu0 0.0
    %504 = vmatprep.subr.mxu0 0.0
    %505 = vmatpush2.msra.mxu0 0.0
    %506 = vmatprep.subr.mxu0 0.0
    %507 = vmatpush2.msra.mxu0 0.0
    %508 = vmatprep.subr.mxu0 0.0
    %509 = vmatpush2.msra.mxu0 0.0
    %510 = vmatprep.subr.mxu0 0.0
    %511 = vmatpush2.msra.mxu0 0.0
    %512 = vmatprep.subr.mxu0 0.0
    %513 = vmatpush2.msra.mxu0 0.0
    %514 = vmatprep.subr.mxu0 0.0
    %515 = vmatpush2.msra.mxu0 0.0
    %516 = vmatprep.subr.mxu0 0.0
    %517 = vmatpush2.msra.mxu0 0.0
    %518 = vmatprep.subr.mxu0 0.0
    %519 = vmatpush2.msra.mxu0 0.0
    %520 = vmatprep.subr.mxu0 0.0
    %521 = vmatpush2.msra.mxu0 0.0
    %522 = vmatprep.subr.mxu0 %v367
    %523 = vmatpush2.msra.mxu0 %v366
    %524 = vmatprep.subr.mxu0 %v364
    %525 = vmatpush2.msra.mxu0 %v363
    %526 = vmatprep.subr.mxu0 %v361
    %527 = vmatpush2.msra.mxu0 %v360
    %528 = vmatprep.subr.mxu0 %v358
    %529 = vmatpush2.msra.mxu0 %v357
    %530 = vmatprep.mubr.f32.mxu0 %v419
    %531 = vmatmul.mubr.f32.gmra.mxu0 %v215
    %v532 = vpop.f32.mrf.mxu0
    %v533 = vadd.f32 %v369, %v532
    %v534 = vpop.f32.mrf.mxu0
    %v535 = vadd.f32 %v370, %v534
    %536 = vmatprep.mubr.f32.mxu0 %v422
    %537 = vmatmul.mubr.f32.gmra.mxu0 %v221
    %v538 = vpop.f32.mrf.mxu0
    %v539 = vadd.f32 %v372, %v538
    %v540 = vpop.f32.mrf.mxu0
    %v541 = vadd.f32 %v373, %v540
    %542 = vmatprep.mubr.f32.mxu0 %v425
    %543 = vmatmul.mubr.f32.gmra.mxu0 %v227
    %v544 = vpop.f32.mrf.mxu0
    %v545 = vadd.f32 %v375, %v544
    %v546 = vpop.f32.mrf.mxu0
    %v547 = vadd.f32 %v376, %v546
    %548 = vmatprep.mubr.f32.mxu0 %v428
    %549 = vmatmul.mubr.f32.gmra.mxu0 %v233
    %v550 = vpop.f32.mrf.mxu0
    %v551 = vadd.f32 %v378, %v550
    %v552 = vpop.f32.mrf.mxu0
    %v553 = vadd.f32 %v379, %v552
    %554 = vmatprep.mubr.f32.mxu0 %v431
    %555 = vmatmul.mubr.f32.gmra.mxu0 %v239
    %v556 = vpop.f32.mrf.mxu0
    %v557 = vadd.f32 %v381, %v556
    %v558 = vpop.f32.mrf.mxu0
    %v559 = vadd.f32 %v382, %v558
    %560 = vmatprep.mubr.f32.mxu0 %v434
    %561 = vmatmul.mubr.f32.gmra.mxu0 %v245
    %v562 = vpop.f32.mrf.mxu0
    %v563 = vadd.f32 %v384, %v562
    %v564 = vpop.f32.mrf.mxu0
    %v565 = vadd.f32 %v385, %v564
    %566 = vmatprep.mubr.f32.mxu0 %v437
    %567 = vmatmul.mubr.f32.gmra.mxu0 %v251
    %v568 = vpop.f32.mrf.mxu0
    %v569 = vadd.f32 %v387, %v568
    %v570 = vpop.f32.mrf.mxu0
    %v571 = vadd.f32 %v388, %v570
    %572 = vmatprep.mubr.f32.mxu0 %v440
    %573 = vmatmul.mubr.f32.gmra.mxu0 %v257
    %v574 = vpop.f32.mrf.mxu0
    %v575 = vadd.f32 %v390, %v574
    %v576 = vpop.f32.mrf.mxu0
    %v577 = vadd.f32 %v391, %v576
    %578 = vmatprep.mubr.f32.mxu0 %v443
    %579 = vmatmul.mubr.f32.gmra.mxu0 %v263
    %v580 = vpop.f32.mrf.mxu0
    %v581 = vadd.f32 %v393, %v580
    %v582 = vpop.f32.mrf.mxu0
    %v583 = vadd.f32 %v394, %v582
    %584 = vmatprep.mubr.f32.mxu0 %v446
    %585 = vmatmul.mubr.f32.gmra.mxu0 %v269
    %v586 = vpop.f32.mrf.mxu0
    %v587 = vadd.f32 %v396, %v586
    %v588 = vpop.f32.mrf.mxu0
    %v589 = vadd.f32 %v397, %v588
    %590 = vmatprep.mubr.f32.mxu0 %v449
    %591 = vmatmul.mubr.f32.gmra.mxu0 %v275
    %v592 = vpop.f32.mrf.mxu0
    %v593 = vadd.f32 %v399, %v592
    %v594 = vpop.f32.mrf.mxu0
    %v595 = vadd.f32 %v400, %v594
    %596 = vmatprep.mubr.f32.mxu0 %v452
    %597 = vmatmul.mubr.f32.gmra.mxu0 %v281
    %v598 = vpop.f32.mrf.mxu0
    %v599 = vadd.f32 %v402, %v598
    %v600 = vpop.f32.mrf.mxu0
    %v601 = vadd.f32 %v403, %v600
    %602 = vmatprep.mubr.f32.mxu0 %v455
    %603 = vmatmul.mubr.f32.gmra.mxu0 %v287
    %v604 = vpop.f32.mrf.mxu0
    %v605 = vadd.f32 %v405, %v604
    %v606 = vpop.f32.mrf.mxu0
    %v607 = vadd.f32 %v406, %v606
    %608 = vmatprep.mubr.f32.mxu0 %v458
    %609 = vmatmul.mubr.f32.gmra.mxu0 %v293
    %v610 = vpop.f32.mrf.mxu0
    %v611 = vadd.f32 %v408, %v610
    %v612 = vpop.f32.mrf.mxu0
    %v613 = vadd.f32 %v409, %v612
    %614 = vmatprep.mubr.f32.mxu0 %v461
    %615 = vmatmul.mubr.f32.gmra.mxu0 %v299
    %v616 = vpop.f32.mrf.mxu0
    %v617 = vadd.f32 %v411, %v616
    %v618 = vpop.f32.mrf.mxu0
    %v619 = vadd.f32 %v412, %v618
    %620 = vmatprep.mubr.f32.mxu0 %v464
    %621 = vmatmul.mubr.f32.gmra.mxu0 %v305
    %v622 = vpop.f32.mrf.mxu0
    %v623 = vadd.f32 %v414, %v622
    %v624 = vpop.f32.mrf.mxu0
    %v625 = vadd.f32 %v415, %v624
    %626 = vdwg.mxu0
    %627 = vmatprep.subr.mxu0 0.0
    %628 = vmatpush1.msra.mxu0 %v356
    %629 = vmatprep.subr.mxu0 0.0
    %630 = vmatpush1.msra.mxu0 %v353
    %631 = vmatprep.subr.mxu0 0.0
    %632 = vmatpush1.msra.mxu0 %v350
    %633 = vmatprep.subr.mxu0 0.0
    %634 = vmatpush1.msra.mxu0 %v347
    %635 = vmatprep.subr.mxu0 0.0
    %636 = vmatpush1.msra.mxu0 %v344
    %637 = vmatprep.subr.mxu0 0.0
    %638 = vmatpush1.msra.mxu0 %v341
    %639 = vmatprep.subr.mxu0 0.0
    %640 = vmatpush1.msra.mxu0 %v338
    %641 = vmatprep.subr.mxu0 0.0
    %642 = vmatpush1.msra.mxu0 %v335
    %643 = vmatprep.subr.mxu0 0.0
    %644 = vmatpush1.msra.mxu0 %v332
    %645 = vmatprep.subr.mxu0 0.0
    %646 = vmatpush1.msra.mxu0 %v329
    %647 = vmatprep.subr.mxu0 0.0
    %648 = vmatpush1.msra.mxu0 %v326
    %649 = vmatprep.subr.mxu0 0.0
    %650 = vmatpush1.msra.mxu0 %v323
    %651 = vmatprep.subr.mxu0 0.0
    %652 = vmatpush1.msra.mxu0 %v320
    %653 = vmatprep.subr.mxu0 0.0
    %654 = vmatpush1.msra.mxu0 %v317
    %655 = vmatprep.subr.mxu0 0.0
    %656 = vmatpush1.msra.mxu0 %v314
    %657 = vmatprep.subr.mxu0 0.0
    %658 = vmatpush1.msra.mxu0 %v311
    %659 = vmatprep.subr.mxu0 0.0
    %660 = vmatpush2.msra.mxu0 0.0
    %661 = vmatprep.subr.mxu0 0.0
    %662 = vmatpush2.msra.mxu0 0.0
    %663 = vmatprep.subr.mxu0 0.0
    %664 = vmatpush2.msra.mxu0 0.0
    %665 = vmatprep.subr.mxu0 0.0
    %666 = vmatpush2.msra.mxu0 0.0
    %667 = vmatprep.subr.mxu0 0.0
    %668 = vmatpush2.msra.mxu0 0.0
    %669 = vmatprep.subr.mxu0 0.0
    %670 = vmatpush2.msra.mxu0 0.0
    %671 = vmatprep.subr.mxu0 0.0
    %672 = vmatpush2.msra.mxu0 0.0
    %673 = vmatprep.subr.mxu0 0.0
    %674 = vmatpush2.msra.mxu0 0.0
    %675 = vmatprep.subr.mxu0 0.0
    %676 = vmatpush2.msra.mxu0 0.0
    %677 = vmatprep.subr.mxu0 0.0
    %678 = vmatpush2.msra.mxu0 0.0
    %679 = vmatprep.subr.mxu0 0.0
    %680 = vmatpush2.msra.mxu0 0.0
    %681 = vmatprep.subr.mxu0 0.0
    %682 = vmatpush2.msra.mxu0 0.0
    %683 = vmatprep.subr.mxu0 0.0
    %684 = vmatpush2.msra.mxu0 %v368
    %685 = vmatprep.subr.mxu0 0.0
    %686 = vmatpush2.msra.mxu0 %v365
    %687 = vmatprep.subr.mxu0 0.0
    %688 = vmatpush2.msra.mxu0 %v362
    %689 = vmatprep.subr.mxu0 0.0
    %690 = vmatpush2.msra.mxu0 %v359
    %691 = vmatprep.mubr.f32.mxu0 %v419
    %692 = vmatmul.mubr.f32.gmra.mxu0 %v215
    %v693 = vpop.f32.mrf.mxu0
    %v694 = vadd.f32 %v371, %v693
    %v695 = vpop.f32.mrf.mxu0
    %696 = vmatprep.mubr.f32.mxu0 %v422
    %697 = vmatmul.mubr.f32.gmra.mxu0 %v221
    %v698 = vpop.f32.mrf.mxu0
    %v699 = vadd.f32 %v374, %v698
    %v700 = vpop.f32.mrf.mxu0
    %701 = vmatprep.mubr.f32.mxu0 %v425
    %702 = vmatmul.mubr.f32.gmra.mxu0 %v227
    %v703 = vpop.f32.mrf.mxu0
    %v704 = vadd.f32 %v377, %v703
    %v705 = vpop.f32.mrf.mxu0
    %706 = vmatprep.mubr.f32.mxu0 %v428
    %707 = vmatmul.mubr.f32.gmra.mxu0 %v233
    %v708 = vpop.f32.mrf.mxu0
    %v709 = vadd.f32 %v380, %v708
    %v710 = vpop.f32.mrf.mxu0
    %711 = vmatprep.mubr.f32.mxu0 %v431
    %712 = vmatmul.mubr.f32.gmra.mxu0 %v239
    %v713 = vpop.f32.mrf.mxu0
    %v714 = vadd.f32 %v383, %v713
    %v715 = vpop.f32.mrf.mxu0
    %716 = vmatprep.mubr.f32.mxu0 %v434
    %717 = vmatmul.mubr.f32.gmra.mxu0 %v245
    %v718 = vpop.f32.mrf.mxu0
    %v719 = vadd.f32 %v386, %v718
    %v720 = vpop.f32.mrf.mxu0
    %721 = vmatprep.mubr.f32.mxu0 %v437
    %722 = vmatmul.mubr.f32.gmra.mxu0 %v251
    %v723 = vpop.f32.mrf.mxu0
    %v724 = vadd.f32 %v389, %v723
    %v725 = vpop.f32.mrf.mxu0
    %726 = vmatprep.mubr.f32.mxu0 %v440
    %727 = vmatmul.mubr.f32.gmra.mxu0 %v257
    %v728 = vpop.f32.mrf.mxu0
    %v729 = vadd.f32 %v392, %v728
    %v730 = vpop.f32.mrf.mxu0
    %731 = vmatprep.mubr.f32.mxu0 %v443
    %732 = vmatmul.mubr.f32.gmra.mxu0 %v263
    %v733 = vpop.f32.mrf.mxu0
    %v734 = vadd.f32 %v395, %v733
    %v735 = vpop.f32.mrf.mxu0
    %736 = vmatprep.mubr.f32.mxu0 %v446
    %737 = vmatmul.mubr.f32.gmra.mxu0 %v269
    %v738 = vpop.f32.mrf.mxu0
    %v739 = vadd.f32 %v398, %v738
    %v740 = vpop.f32.mrf.mxu0
    %741 = vmatprep.mubr.f32.mxu0 %v449
    %742 = vmatmul.mubr.f32.gmra.mxu0 %v275
    %v743 = vpop.f32.mrf.mxu0
    %v744 = vadd.f32 %v401, %v743
    %v745 = vpop.f32.mrf.mxu0
    %746 = vmatprep.mubr.f32.mxu0 %v452
    %747 = vmatmul.mubr.f32.gmra.mxu0 %v281
    %v748 = vpop.f32.mrf.mxu0
    %v749 = vadd.f32 %v404, %v748
    %v750 = vpop.f32.mrf.mxu0
    %751 = vmatprep.mubr.f32.mxu0 %v455
    %752 = vmatmul.mubr.f32.gmra.mxu0 %v287
    %v753 = vpop.f32.mrf.mxu0
    %v754 = vadd.f32 %v407, %v753
    %v755 = vpop.f32.mrf.mxu0
    %756 = vmatprep.mubr.f32.mxu0 %v458
    %757 = vmatmul.mubr.f32.gmra.mxu0 %v293
    %v758 = vpop.f32.mrf.mxu0
    %v759 = vadd.f32 %v410, %v758
    %v760 = vpop.f32.mrf.mxu0
    %761 = vmatprep.mubr.f32.mxu0 %v461
    %762 = vmatmul.mubr.f32.gmra.mxu0 %v299
    %v763 = vpop.f32.mrf.mxu0
    %v764 = vadd.f32 %v413, %v763
    %v765 = vpop.f32.mrf.mxu0
    %766 = vmatprep.mubr.f32.mxu0 %v464
    %767 = vmatmul.mubr.f32.gmra.mxu0 %v305
    %v768 = vpop.f32.mrf.mxu0
    %v769 = vadd.f32 %v416, %v768
    %v770 = vpop.f32.mrf.mxu0
    %771 = vdwg.mxu0
    %v772 = vmax.f32 %v533, 0.0
    %v773 = vmax.f32 %v535, 0.0
    %v774 = vmax.f32 %v694, 0.0
    %v775 = vmax.f32 %v539, 0.0
    %v776 = vmax.f32 %v541, 0.0
    %v777 = vmax.f32 %v699, 0.0
    %v778 = vmax.f32 %v545, 0.0
    %v779 = vmax.f32 %v547, 0.0
    %v780 = vmax.f32 %v704, 0.0
    %v781 = vmax.f32 %v551, 0.0
    %v782 = vmax.f32 %v553, 0.0
    %v783 = vmax.f32 %v709, 0.0
    %v784 = vmax.f32 %v557, 0.0
    %v785 = vmax.f32 %v559, 0.0
    %v786 = vmax.f32 %v714, 0.0
    %v787 = vmax.f32 %v563, 0.0
    %v788 = vmax.f32 %v565, 0.0
    %v789 = vmax.f32 %v719, 0.0
    %v790 = vmax.f32 %v569, 0.0
    %v791 = vmax.f32 %v571, 0.0
    %v792 = vmax.f32 %v724, 0.0
    %v793 = vmax.f32 %v575, 0.0
    %v794 = vmax.f32 %v577, 0.0
    %v795 = vmax.f32 %v729, 0.0
    %v796 = vmax.f32 %v581, 0.0
    %v797 = vmax.f32 %v583, 0.0
    %v798 = vmax.f32 %v734, 0.0
    %v799 = vmax.f32 %v587, 0.0
    %v800 = vmax.f32 %v589, 0.0
    %v801 = vmax.f32 %v739, 0.0
    %v802 = vmax.f32 %v593, 0.0
    %v803 = vmax.f32 %v595, 0.0
    %v804 = vmax.f32 %v744, 0.0
    %v805 = vmax.f32 %v599, 0.0
    %v806 = vmax.f32 %v601, 0.0
    %v807 = vmax.f32 %v749, 0.0
    %v808 = vmax.f32 %v605, 0.0
    %v809 = vmax.f32 %v607, 0.0
    %v810 = vmax.f32 %v754, 0.0
    %v811 = vmax.f32 %v611, 0.0
    %v812 = vmax.f32 %v613, 0.0
    %v813 = vmax.f32 %v759, 0.0
    %v814 = vmax.f32 %v617, 0.0
    %v815 = vmax.f32 %v619, 0.0
    %v816 = vmax.f32 %v764, 0.0
    %v817 = vmax.f32 %v623, 0.0
    %v818 = vmax.f32 %v625, 0.0
    %v819 = vmax.f32 %v769, 0.0
    %v820 = vmax.f32 %v772, %v775
    %v821 = vrot.slane %v820, 4
    %v822 = vmax.f32 %v820, %v821
    %v823 = vrot.slane %v822, 2
    %v824 = vmax.f32 %v822, %v823
    %v825 = vrot.slane %v824, 1
    %v826 = vmax.f32 %v824, %v825
    %v827 = vmax.f32 %v773, %v776
    %v828 = vrot.slane %v827, 4
    %v829 = vmax.f32 %v827, %v828
    %v830 = vrot.slane %v829, 2
    %v831 = vmax.f32 %v829, %v830
    %v832 = vrot.slane %v831, 1
    %v833 = vmax.f32 %v831, %v832
    %v834 = vmax.f32 %v774, %v777
    %v835 = vrot.slane %v834, 4
    %v836 = vmax.f32 %v834, %v835
    %v837 = vrot.slane %v836, 2
    %v838 = vmax.f32 %v836, %v837
    %v839 = vrot.slane %v838, 1
    %v840 = vmax.f32 %v838, %v839
    %v841 = vmax.f32 %v778, %v781
    %v842 = vrot.slane %v841, 4
    %v843 = vmax.f32 %v841, %v842
    %v844 = vrot.slane %v843, 2
    %v845 = vmax.f32 %v843, %v844
    %v846 = vrot.slane %v845, 1
    %v847 = vmax.f32 %v845, %v846
    %v848 = vmax.f32 %v779, %v782
    %v849 = vrot.slane %v848, 4
    %v850 = vmax.f32 %v848, %v849
    %v851 = vrot.slane %v850, 2
    %v852 = vmax.f32 %v850, %v851
    %v853 = vrot.slane %v852, 1
    %v854 = vmax.f32 %v852, %v853
    %v855 = vmax.f32 %v780, %v783
    %v856 = vrot.slane %v855, 4
    %v857 = vmax.f32 %v855, %v856
    %v858 = vrot.slane %v857, 2
    %v859 = vmax.f32 %v857, %v858
    %v860 = vrot.slane %v859, 1
    %v861 = vmax.f32 %v859, %v860
    %v862 = vmax.f32 %v784, %v787
    %v863 = vrot.slane %v862, 4
    %v864 = vmax.f32 %v862, %v863
    %v865 = vrot.slane %v864, 2
    %v866 = vmax.f32 %v864, %v865
    %v867 = vrot.slane %v866, 1
    %v868 = vmax.f32 %v866, %v867
    %v869 = vmax.f32 %v785, %v788
    %v870 = vrot.slane %v869, 4
    %v871 = vmax.f32 %v869, %v870
    %v872 = vrot.slane %v871, 2
    %v873 = vmax.f32 %v871, %v872
    %v874 = vrot.slane %v873, 1
    %v875 = vmax.f32 %v873, %v874
    %v876 = vmax.f32 %v786, %v789
    %v877 = vrot.slane %v876, 4
    %v878 = vmax.f32 %v876, %v877
    %v879 = vrot.slane %v878, 2
    %v880 = vmax.f32 %v878, %v879
    %v881 = vrot.slane %v880, 1
    %v882 = vmax.f32 %v880, %v881
    %v883 = vmax.f32 %v790, %v793
    %v884 = vrot.slane %v883, 4
    %v885 = vmax.f32 %v883, %v884
    %v886 = vrot.slane %v885, 2
    %v887 = vmax.f32 %v885, %v886
    %v888 = vrot.slane %v887, 1
    %v889 = vmax.f32 %v887, %v888
    %v890 = vmax.f32 %v791, %v794
    %v891 = vrot.slane %v890, 4
    %v892 = vmax.f32 %v890, %v891
    %v893 = vrot.slane %v892, 2
    %v894 = vmax.f32 %v892, %v893
    %v895 = vrot.slane %v894, 1
    %v896 = vmax.f32 %v894, %v895
    %v897 = vmax.f32 %v792, %v795
    %v898 = vrot.slane %v897, 4
    %v899 = vmax.f32 %v897, %v898
    %v900 = vrot.slane %v899, 2
    %v901 = vmax.f32 %v899, %v900
    %v902 = vrot.slane %v901, 1
    %v903 = vmax.f32 %v901, %v902
    %v904 = vmax.f32 %v796, %v799
    %v905 = vrot.slane %v904, 4
    %v906 = vmax.f32 %v904, %v905
    %v907 = vrot.slane %v906, 2
    %v908 = vmax.f32 %v906, %v907
    %v909 = vrot.slane %v908, 1
    %v910 = vmax.f32 %v908, %v909
    %v911 = vmax.f32 %v797, %v800
    %v912 = vrot.slane %v911, 4
    %v913 = vmax.f32 %v911, %v912
    %v914 = vrot.slane %v913, 2
    %v915 = vmax.f32 %v913, %v914
    %v916 = vrot.slane %v915, 1
    %v917 = vmax.f32 %v915, %v916
    %v918 = vmax.f32 %v798, %v801
    %v919 = vrot.slane %v918, 4
    %v920 = vmax.f32 %v918, %v919
    %v921 = vrot.slane %v920, 2
    %v922 = vmax.f32 %v920, %v921
    %v923 = vrot.slane %v922, 1
    %v924 = vmax.f32 %v922, %v923
    %v925 = vmax.f32 %v802, %v805
    %v926 = vrot.slane %v925, 4
    %v927 = vmax.f32 %v925, %v926
    %v928 = vrot.slane %v927, 2
    %v929 = vmax.f32 %v927, %v928
    %v930 = vrot.slane %v929, 1
    %v931 = vmax.f32 %v929, %v930
    %v932 = vmax.f32 %v803, %v806
    %v933 = vrot.slane %v932, 4
    %v934 = vmax.f32 %v932, %v933
    %v935 = vrot.slane %v934, 2
    %v936 = vmax.f32 %v934, %v935
    %v937 = vrot.slane %v936, 1
    %v938 = vmax.f32 %v936, %v937
    %v939 = vmax.f32 %v804, %v807
    %v940 = vrot.slane %v939, 4
    %v941 = vmax.f32 %v939, %v940
    %v942 = vrot.slane %v941, 2
    %v943 = vmax.f32 %v941, %v942
    %v944 = vrot.slane %v943, 1
    %v945 = vmax.f32 %v943, %v944
    %v946 = vmax.f32 %v808, %v811
    %v947 = vrot.slane %v946, 4
    %v948 = vmax.f32 %v946, %v947
    %v949 = vrot.slane %v948, 2
    %v950 = vmax.f32 %v948, %v949
    %v951 = vrot.slane %v950, 1
    %v952 = vmax.f32 %v950, %v951
    %v953 = vmax.f32 %v809, %v812
    %v954 = vrot.slane %v953, 4
    %v955 = vmax.f32 %v953, %v954
    %v956 = vrot.slane %v955, 2
    %v957 = vmax.f32 %v955, %v956
    %v958 = vrot.slane %v957, 1
    %v959 = vmax.f32 %v957, %v958
    %v960 = vmax.f32 %v810, %v813
    %v961 = vrot.slane %v960, 4
    %v962 = vmax.f32 %v960, %v961
    %v963 = vrot.slane %v962, 2
    %v964 = vmax.f32 %v962, %v963
    %v965 = vrot.slane %v964, 1
    %v966 = vmax.f32 %v964, %v965
    %v967 = vmax.f32 %v814, %v817
    %v968 = vrot.slane %v967, 4
    %v969 = vmax.f32 %v967, %v968
    %v970 = vrot.slane %v969, 2
    %v971 = vmax.f32 %v969, %v970
    %v972 = vrot.slane %v971, 1
    %v973 = vmax.f32 %v971, %v972
    %v974 = vmax.f32 %v815, %v818
    %v975 = vrot.slane %v974, 4
    %v976 = vmax.f32 %v974, %v975
    %v977 = vrot.slane %v976, 2
    %v978 = vmax.f32 %v976, %v977
    %v979 = vrot.slane %v978, 1
    %v980 = vmax.f32 %v978, %v979
    %v981 = vmax.f32 %v816, %v819
    %v982 = vrot.slane %v981, 4
    %v983 = vmax.f32 %v981, %v982
    %v984 = vrot.slane %v983, 2
    %v985 = vmax.f32 %v983, %v984
    %v986 = vrot.slane %v985, 1
    %v987 = vmax.f32 %v985, %v986
    %v988 = vld [vmem:[#allocation5] sm:$0xff]
    %v989 = vld [vmem:[#allocation5 + $0x8] sm:$0xff]
    %v990 = vld [vmem:[#allocation5 + $0x10] sm:$0xff]
    %v991 = vld [vmem:[#allocation5 + $0x18] sm:$0xff]
    %v992 = vld [vmem:[#allocation5 + $0x20] sm:$0xff]
    %v993 = vld [vmem:[#allocation5 + $0x28] sm:$0xff]
    %v994 = vld [vmem:[#allocation5 + $0x30] sm:$0xff]
    %v995 = vld [vmem:[#allocation5 + $0x38] sm:$0xff]
    %v996 = vld [vmem:[#allocation5 + $0x40] sm:$0xff]
    %v997 = vld [vmem:[#allocation5 + $0x48] sm:$0xff]
    %v998 = vld [vmem:[#allocation5 + $0x50] sm:$0xff]
    %v999 = vld [vmem:[#allocation5 + $0x58] sm:$0xff]
    %v1000 = vld [vmem:[#allocation5 + $0x60] sm:$0xff]
    %v1001 = vld [vmem:[#allocation5 + $0x68] sm:$0xff]
    %v1002 = vld [vmem:[#allocation5 + $0x70] sm:$0xff]
    %v1003 = vld [vmem:[#allocation5 + $0x78] sm:$0xff]
    %v1004 = vld [vmem:[#allocation5 + $0x80] sm:$0xff]
    %v1005 = vld [vmem:[#allocation5 + $0x88] sm:$0xff]
    %v1006 = vld [vmem:[#allocation5 + $0x90] sm:$0xff]
    %v1007 = vld [vmem:[#allocation5 + $0x98] sm:$0xff]
    %v1008 = vld [vmem:[#allocation5 + $0xa0] sm:$0xff]
    %v1009 = vld [vmem:[#allocation5 + $0xa8] sm:$0xff]
    %v1010 = vld [vmem:[#allocation5 + $0xb0] sm:$0xff]
    %v1011 = vld [vmem:[#allocation5 + $0xb8] sm:$0xff]
    %v1012 = vld [vmem:[#allocation5 + $0xc0] sm:$0xff]
    %v1013 = vld [vmem:[#allocation5 + $0xc8] sm:$0xff]
    %v1014 = vld [vmem:[#allocation5 + $0xd0] sm:$0xff]
    %v1015 = vld [vmem:[#allocation5 + $0xd8] sm:$0xff]
    %v1016 = vld [vmem:[#allocation5 + $0xe0] sm:$0xff]
    %v1017 = vld [vmem:[#allocation5 + $0xe8] sm:$0xff]
    %v1018 = vld [vmem:[#allocation5 + $0xf0] sm:$0xff]
    %v1019 = vld [vmem:[#allocation5 + $0xf8] sm:$0xff]
    %v1020 = vld [vmem:[#allocation5 + $0x100] sm:$0xff]
    %v1021 = vld [vmem:[#allocation5 + $0x108] sm:$0xff]
    %v1022 = vld [vmem:[#allocation5 + $0x110] sm:$0xff]
    %v1023 = vld [vmem:[#allocation5 + $0x118] sm:$0xff]
    %v1024 = vld [vmem:[#allocation5 + $0x120] sm:$0xff]
    %v1025 = vld [vmem:[#allocation5 + $0x128] sm:$0xff]
    %v1026 = vld [vmem:[#allocation5 + $0x130] sm:$0xff]
    %v1027 = vld [vmem:[#allocation5 + $0x138] sm:$0xff]
    %v1028 = vld [vmem:[#allocation5 + $0x140] sm:$0xff]
    %v1029 = vld [vmem:[#allocation5 + $0x148] sm:$0xff]
    %v1030 = vld [vmem:[#allocation5 + $0x150] sm:$0xff]
    %v1031 = vld [vmem:[#allocation5 + $0x158] sm:$0xff]
    %v1032 = vld [vmem:[#allocation5 + $0x160] sm:$0xff]
    %v1033 = vld [vmem:[#allocation5 + $0x168] sm:$0xff]
    %v1034 = vld [vmem:[#allocation5 + $0x170] sm:$0xff]
    %v1035 = vld [vmem:[#allocation5 + $0x178] sm:$0xff]
    %v1036 = vld [vmem:[%s5] sm:$0x1]
    %v1038 = vlaneseq
    %v1039 = vshrl.u32 %v1038, 7
    %v1040 = vsub.s32 0, %v1039
    %v1041 = vrot.slane %v1036, %v1040
    %vm1067 = vcmask 1041409
    %v1068 = vsel %vm1067, %v847, %v826
    %vm1069 = vcmask 1042434
    %v1070 = vsel %vm1069, %v868, %v1068
    %vm1071 = vcmask 1043459
    %v1072 = vsel %vm1071, %v889, %v1070
    %vm1073 = vcmask 1044484
    %v1074 = vsel %vm1073, %v910, %v1072
    %vm1075 = vcmask 1045509
    %v1076 = vsel %vm1075, %v931, %v1074
    %vm1077 = vcmask 1046534
    %v1078 = vsel %vm1077, %v952, %v1076
    %vm1079 = vcmask 1047559
    %v1080 = vsel %vm1079, %v973, %v1078
    %v1081 = vsel %vm1067, %v854, %v833
    %v1082 = vsel %vm1069, %v875, %v1081
    %v1083 = vsel %vm1071, %v896, %v1082
    %v1084 = vsel %vm1073, %v917, %v1083
    %v1085 = vsel %vm1075, %v938, %v1084
    %v1086 = vsel %vm1077, %v959, %v1085
    %v1087 = vsel %vm1079, %v980, %v1086
    %v1088 = vsel %vm1067, %v861, %v840
    %v1089 = vsel %vm1069, %v882, %v1088
    %v1090 = vsel %vm1071, %v903, %v1089
    %v1091 = vsel %vm1073, %v924, %v1090
    %v1092 = vsel %vm1075, %v945, %v1091
    %v1093 = vsel %vm1077, %v966, %v1092
    %v1094 = vsel %vm1079, %v987, %v1093
    %1098 = vmatprep.subr.mxu0 0.0
    %1099 = vmatpush1.msra.mxu0 %v1003
    %1100 = vmatprep.subr.mxu0 0.0
    %1101 = vmatpush1.msra.mxu0 %v1002
    %1102 = vmatprep.subr.mxu0 0.0
    %1103 = vmatpush1.msra.mxu0 %v1001
    %1104 = vmatprep.subr.mxu0 0.0
    %1105 = vmatpush1.msra.mxu0 %v1000
    %1106 = vmatprep.subr.mxu0 0.0
    %1107 = vmatpush1.msra.mxu0 %v999
    %1108 = vmatprep.subr.mxu0 0.0
    %1109 = vmatpush1.msra.mxu0 %v998
    %1110 = vmatprep.subr.mxu0 0.0
    %1111 = vmatpush1.msra.mxu0 %v997
    %1112 = vmatprep.subr.mxu0 0.0
    %1113 = vmatpush1.msra.mxu0 %v996
    %1114 = vmatprep.subr.mxu0 0.0
    %1115 = vmatpush1.msra.mxu0 %v995
    %1116 = vmatprep.subr.mxu0 0.0
    %1117 = vmatpush1.msra.mxu0 %v994
    %1118 = vmatprep.subr.mxu0 0.0
    %1119 = vmatpush1.msra.mxu0 %v993
    %1120 = vmatprep.subr.mxu0 0.0
    %1121 = vmatpush1.msra.mxu0 %v992
    %1122 = vmatprep.subr.mxu0 0.0
    %1123 = vmatpush1.msra.mxu0 %v991
    %1124 = vmatprep.subr.mxu0 0.0
    %1125 = vmatpush1.msra.mxu0 %v990
    %1126 = vmatprep.subr.mxu0 0.0
    %1127 = vmatpush1.msra.mxu0 %v989
    %1128 = vmatprep.subr.mxu0 0.0
    %1129 = vmatpush1.msra.mxu0 %v988
    %1130 = vmatprep.subr.mxu0 0.0
    %1131 = vmatpush2.msra.mxu0 %v1019
    %1132 = vmatprep.subr.mxu0 0.0
    %1133 = vmatpush2.msra.mxu0 %v1018
    %1134 = vmatprep.subr.mxu0 0.0
    %1135 = vmatpush2.msra.mxu0 %v1017
    %1136 = vmatprep.subr.mxu0 0.0
    %1137 = vmatpush2.msra.mxu0 %v1016
    %1138 = vmatprep.subr.mxu0 0.0
    %1139 = vmatpush2.msra.mxu0 %v1015
    %1140 = vmatprep.subr.mxu0 0.0
    %1141 = vmatpush2.msra.mxu0 %v1014
    %1142 = vmatprep.subr.mxu0 0.0
    %1143 = vmatpush2.msra.mxu0 %v1013
    %1144 = vmatprep.subr.mxu0 0.0
    %1145 = vmatpush2.msra.mxu0 %v1012
    %1146 = vmatprep.subr.mxu0 0.0
    %1147 = vmatpush2.msra.mxu0 %v1011
    %1148 = vmatprep.subr.mxu0 0.0
    %1149 = vmatpush2.msra.mxu0 %v1010
    %1150 = vmatprep.subr.mxu0 0.0
    %1151 = vmatpush2.msra.mxu0 %v1009
    %1152 = vmatprep.subr.mxu0 0.0
    %1153 = vmatpush2.msra.mxu0 %v1008
    %1154 = vmatprep.subr.mxu0 0.0
    %1155 = vmatpush2.msra.mxu0 %v1007
    %1156 = vmatprep.subr.mxu0 0.0
    %1157 = vmatpush2.msra.mxu0 %v1006
    %1158 = vmatprep.subr.mxu0 0.0
    %1159 = vmatpush2.msra.mxu0 %v1005
    %1160 = vmatprep.subr.mxu0 0.0
    %1161 = vmatpush2.msra.mxu0 %v1004
    %1162 = vmatprep.mubr.f32.mxu0 %v1087
    %1163 = vmatmul.mubr.f32.gmra.mxu0 %v1080
    %v1164 = vpop.f32.mrf.mxu0
    %v1165 = vadd.f32 %v1041, %v1164
    %v1166 = vpop.f32.mrf.mxu0
    %1167 = vdwg.mxu0
    %1168 = vmatprep.subr.mxu0 0.0
    %1169 = vmatpush1.msra.mxu0 %v1035
    %1170 = vmatprep.subr.mxu0 0.0
    %1171 = vmatpush1.msra.mxu0 %v1034
    %1172 = vmatprep.subr.mxu0 0.0
    %1173 = vmatpush1.msra.mxu0 %v1033
    %1174 = vmatprep.subr.mxu0 0.0
    %1175 = vmatpush1.msra.mxu0 %v1032
    %1176 = vmatprep.subr.mxu0 0.0
    %1177 = vmatpush1.msra.mxu0 %v1031
    %1178 = vmatprep.subr.mxu0 0.0
    %1179 = vmatpush1.msra.mxu0 %v1030
    %1180 = vmatprep.subr.mxu0 0.0
    %1181 = vmatpush1.msra.mxu0 %v1029
    %1182 = vmatprep.subr.mxu0 0.0
    %1183 = vmatpush1.msra.mxu0 %v1028
    %1184 = vmatprep.subr.mxu0 0.0
    %1185 = vmatpush1.msra.mxu0 %v1027
    %1186 = vmatprep.subr.mxu0 0.0
    %1187 = vmatpush1.msra.mxu0 %v1026
    %1188 = vmatprep.subr.mxu0 0.0
    %1189 = vmatpush1.msra.mxu0 %v1025
    %1190 = vmatprep.subr.mxu0 0.0
    %1191 = vmatpush1.msra.mxu0 %v1024
    %1192 = vmatprep.subr.mxu0 0.0
    %1193 = vmatpush1.msra.mxu0 %v1023
    %1194 = vmatprep.subr.mxu0 0.0
    %1195 = vmatpush1.msra.mxu0 %v1022
    %1196 = vmatprep.subr.mxu0 0.0
    %1197 = vmatpush1.msra.mxu0 %v1021
    %1198 = vmatprep.subr.mxu0 0.0
    %1199 = vmatpush1.msra.mxu0 %v1020
    %1200 = vmatprep.subr.mxu0 0.0
    %1201 = vmatpush2.msra.mxu0 0.0
    %1202 = vmatprep.subr.mxu0 0.0
    %1203 = vmatpush2.msra.mxu0 0.0
    %1204 = vmatprep.subr.mxu0 0.0
    %1205 = vmatpush2.msra.mxu0 0.0
    %1206 = vmatprep.subr.mxu0 0.0
    %1207 = vmatpush2.msra.mxu0 0.0
    %1208 = vmatprep.subr.mxu0 0.0
    %1209 = vmatpush2.msra.mxu0 0.0
    %1210 = vmatprep.subr.mxu0 0.0
    %1211 = vmatpush2.msra.mxu0 0.0
    %1212 = vmatprep.subr.mxu0 0.0
    %1213 = vmatpush2.msra.mxu0 0.0
    %1214 = vmatprep.subr.mxu0 0.0
    %1215 = vmatpush2.msra.mxu0 0.0
    %1216 = vmatprep.subr.mxu0 0.0
    %1217 = vmatpush2.msra.mxu0 0.0
    %1218 = vmatprep.subr.mxu0 0.0
    %1219 = vmatpush2.msra.mxu0 0.0
    %1220 = vmatprep.subr.mxu0 0.0
    %1221 = vmatpush2.msra.mxu0 0.0
    %1222 = vmatprep.subr.mxu0 0.0
    %1223 = vmatpush2.msra.mxu0 0.0
    %1224 = vmatprep.subr.mxu0 0.0
    %1225 = vmatpush2.msra.mxu0 0.0
    %1226 = vmatprep.subr.mxu0 0.0
    %1227 = vmatpush2.msra.mxu0 0.0
    %1228 = vmatprep.subr.mxu0 0.0
    %1229 = vmatpush2.msra.mxu0 0.0
    %1230 = vmatprep.subr.mxu0 0.0
    %1231 = vmatpush2.msra.mxu0 0.0
    %1232 = vmatprep.mubr.f32.mxu0 0.0
    %1233 = vmatmul.mubr.f32.gmra.mxu0 %v1094
    %v1234 = vpop.f32.mrf.mxu0
    %v1235 = vadd.f32 %v1165, %v1234
    %v1236 = vpop.f32.mrf.mxu0
    %1237 = vdwg.mxu0
    %1238 = vmax.xlane.f32.xlu0 %v1235
    %v1239 = vpop.xlane.xlu0 %1238
    %v1240 = vsub.f32 %v1235, %v1239
    %v1241 = vmul.f32 %v1240, 1.442695
    %v1242 = vpow.pop %v1241
    %1243 = vadd.xlane.f32.xlu0 %v1242
    %v1244 = vpop.xlane.xlu0 %1243
    %v1245 = vrcp.pop %v1244
    %v1246 = vmul.f32 %v1242, %v1245
    %1247 = vst [vmem:[#allocation7] sm:$0xff] %v1246
    // Predicated region
    $region34: #{tpu_custom_call.1} parent=1 // pred_check
      _
    $region35: #{tpu_custom_call.1} parent=1 // pred_check_branch
      %1249 = sbr.rel (0) target = $region37
    $region36: #{tpu_custom_call.1} parent=1 // pred_region
      %s1251 = ssub.s32 128, 128
      %1252 = vsyncadd [#allocation4], %s1251
      %s1254 = sshll.u32 [#allocation7], 4
      %s1255 = int_to_ptr.vmem [resolvable:$true] %s1254
      %1257 = dma.vmem_to_hbm [thread:$0]  %s1255, 128, %s6, [#allocation4]
    $region37: #{tpu_custom_call.1} parent=1 // pred_fallthru
      _
    // Predicated region
    $region38: #{tpu_custom_call.1} parent=1 // pred_check
      _
    $region39: #{tpu_custom_call.1} parent=1 // pred_check_branch
      %1259 = sbr.rel (0) target = $region41
    $region40: #{tpu_custom_call.1} parent=1 // pred_region
      %1260 = dma.done [#allocation4], 128
    $region41: #{tpu_custom_call.1} parent=1 // pred_fallthru
      _
    %1261 = vsyncpa [#allocation3], 1
    %1262 = vsyncpa [#allocation6], 1
    %1263 = vsyncpa [#allocation4], 1

</llo_original>
